<compile_context>
chip_gen: v5e
topology: v5e:2x2
jax: 0.10.0
libtpu: 0.0.40
codegen_flags: <defaults>
</compile_context>

<pallas_src>
import functools
import math

import jax
import jax.numpy as jnp
from jax.experimental import pallas as pl
from jax.experimental.pallas import tpu as pltpu


def _gelu_exact(x):
    # nn.GELU() default = exact (erf-based) GELU.
    return 0.5 * x * (1.0 + jax.lax.erf(x * (1.0 / math.sqrt(2.0))))


# ----------------------------------------------------------------------------
# Kernel A: latent-query attention pooling (q folded into the projection).
# Grid = (batch blocks ["parallel"], N chunks ["arbitrary"]).
# ----------------------------------------------------------------------------
def _attn_pool_kernel(x_ref, wsv_ref, bsv_ref, exp_ref, o_ref,
                      m_ref, l_ref, acc_ref):
    f32 = jnp.float32
    bt, nk, c = x_ref.shape
    h = exp_ref.shape[0]
    mm_dt = wsv_ref.dtype
    kn = pl.program_id(1)

    @pl.when(kn == 0)
    def _():
        m_ref[...] = jnp.full(m_ref.shape, -jnp.inf, f32)
        l_ref[...] = jnp.zeros(l_ref.shape, f32)
        acc_ref[...] = jnp.zeros(acc_ref.shape, f32)

    # Single fused matmul: columns [0, C) are V (lane offset 0, aligned),
    # columns [C, C+H) are the per-head scores (latent query pre-folded and
    # pre-scaled by head_dim**-0.5 in the wrapper).
    x = x_ref[...].astype(mm_dt).reshape(bt * nk, c)
    sv = jnp.dot(x, wsv_ref[...], preferred_element_type=f32) + bsv_ref[...]
    v = sv[:, :c]                                      # (bt*nk, C)
    s = sv[:, c:].reshape(bt, nk, h)                   # (bt, nk, H)

    # Online (flash-style) softmax over the N axis.
    m_prev = m_ref[...]                                # (bt, H)
    m_new = jnp.maximum(m_prev, jnp.max(s, axis=1))
    alpha = jnp.exp(m_prev - m_new)                    # (bt, H)
    p = jnp.exp(s - m_new[:, None, :])                 # (bt, nk, H)
    l_ref[...] = alpha * l_ref[...] + jnp.sum(p, axis=1)

    # Head-expand via a bf16 one-hot matmul (exact for 0/1 operands).
    p_full = jnp.dot(p.reshape(bt * nk, h).astype(mm_dt), exp_ref[...],
                     preferred_element_type=f32)       # (bt*nk, C)
    alpha_full = jnp.dot(alpha.astype(mm_dt), exp_ref[...],
                         preferred_element_type=f32)   # (bt, C)
    part = jnp.sum((p_full * v).reshape(bt, nk, c), axis=1)
    acc_ref[...] = alpha_full * acc_ref[...] + part
    m_ref[...] = m_new

    @pl.when(kn == pl.num_programs(1) - 1)
    def _():
        recip = pl.reciprocal(l_ref[...], approx=True)          # (bt, H)
        recip_full = jnp.dot(recip.astype(mm_dt), exp_ref[...],
                             preferred_element_type=f32)        # (bt, C)
        o_ref[...] = (acc_ref[...] * recip_full).astype(o_ref.dtype)


# ----------------------------------------------------------------------------
# Kernel B: output projection + residual MLP over the full pooled (B, C) slab.
# ----------------------------------------------------------------------------
def _proj_mlp_kernel(o_ref, wproj_ref, bproj_ref, wfc1_ref, bfc1_ref,
                     wfc2_ref, bfc2_ref, out_ref):
    f32 = jnp.float32
    mm_dt = wproj_ref.dtype
    o = o_ref[...]
    y = jnp.dot(o.astype(mm_dt), wproj_ref[...],
                preferred_element_type=f32) + bproj_ref[...]
    h1 = _gelu_exact(jnp.dot(y.astype(mm_dt), wfc1_ref[...],
                             preferred_element_type=f32) + bfc1_ref[...])
    h2 = jnp.dot(h1.astype(mm_dt), wfc2_ref[...],
                 preferred_element_type=f32) + bfc2_ref[...]
    out_ref[...] = (y + h2).astype(out_ref.dtype)


# ----------------------------------------------------------------------------
# Helpers.
# ----------------------------------------------------------------------------
@functools.lru_cache(maxsize=None)
def _single_buffer_consts_supported() -> bool:
    """Probe BlockSpec(pipeline_mode=pl.Buffered(1)).

    Constant-index blocks are DMA'd once; single-buffering them halves their
    VMEM footprint (matters at production C where the bf16 weights are ~29 MB).
    """
    def _copy(i_ref, o_ref):
        o_ref[...] = i_ref[...]
    try:
        fn = pl.pallas_call(
            _copy,
            out_shape=jax.ShapeDtypeStruct((8, 128), jnp.float32),
            grid=(1,),
            in_specs=[pl.BlockSpec((8, 128), lambda i: (0, 0),
                                   pipeline_mode=pl.Buffered(1))],
            out_specs=pl.BlockSpec((8, 128), lambda i: (0, 0)),
        )
        jax.block_until_ready(fn(jnp.zeros((8, 128), jnp.float32)))
        return True
    except Exception:  # pragma: no cover - older jax without pipeline_mode
        return False


def _choose_blocks(B, N, C, H, x_itemsize, *,
                   vmem_budget_bytes=24 << 20, max_rows=1024):
    """Pick (block_b, block_n): block_b*block_n LHS rows per grid step, sized
    so the double-buffered x tile + f32 intermediates fit the VMEM budget."""
    per_row = (2 * C * x_itemsize      # x tile (2 pipeline buffers)
               + 4 * (C + H)           # fused sv slab (f32)
               + 4 * C + 2 * C         # p_full (f32) + bf16 staging
               + 4 * H)                # p (f32)
    rows_budget = max(8, min(max_rows, vmem_budget_bytes // per_row))

    # Sequence tiling: halve N while over budget and the half stays 8-aligned.
    block_n = N
    while block_n > rows_budget and block_n % 2 == 0 and (block_n // 2) % 8 == 0:
        block_n //= 2

    # Batch tiling: largest 8-aligned divisor of B that fits; prefer >= 2 grid
    # steps on the batch axis so a v7x megacore can split the work.
    aligned = [d for d in range(1, B + 1)
               if B % d == 0 and (d % 8 == 0 or d == B)]
    fits = [d for d in aligned if d * block_n <= rows_budget] or [min(aligned)]
    multi = [d for d in fits if B // d >= 2]
    block_b = max(multi) if multi else max(fits)
    return block_b, block_n


def _pick_row_block(B, target_rows=512):
    """Row block for the proj+MLP kernel (8-aligned divisor of B, >=2 steps
    when possible for v7x megacore)."""
    aligned = [d for d in range(1, B + 1)
               if B % d == 0 and (d % 8 == 0 or d == B)]
    fits = [d for d in aligned if d <= target_rows] or [min(aligned)]
    multi = [d for d in fits if B // d >= 2]
    return max(multi) if multi else max(fits)


def _vmem_limit(estimate_bytes):
    """Explicit scoped-VMEM limit: 2x estimated footprint for headroom,
    clamped to [32 MiB, 64 MiB] (v7x has 64 MiB per TensorCore)."""
    return int(min(max(2 * estimate_bytes, 32 << 20), 64 << 20))


def _vmem_estimate_attn(block_b, block_n, C, H, x_itemsize):
    rows = block_b * block_n
    weights = 2 * C * (C + H) + 4 * (C + H) + 2 * H * C      # single-buffered
    x_tile = 2 * rows * C * x_itemsize                       # double-buffered
    out_tile = 2 * block_b * C * 4
    scratch = block_b * (2 * H + C) * 4
    inter = rows * (4 * (C + H) + 4 * C + 2 * C + 4 * H + 2 * H)
    return weights + x_tile + out_tile + scratch + inter


def _vmem_estimate_mlp(rb, C, Hd):
    weights = 2 * (C * C + C * Hd + Hd * C) + 4 * (C + Hd + C)
    io = 2 * rb * C * 4 * 2
    inter = rb * (6 * (C + Hd + C))
    return weights + io + inter


# ----------------------------------------------------------------------------
# Wrapper.
# ----------------------------------------------------------------------------
def attention_pool_latent(x, params, *, num_heads, block_b=None, block_n=None,
                          mm_dtype=jnp.bfloat16):
    B, N, C = x.shape
    H = num_heads
    Dh = C // H
    f32 = jnp.float32
    out_dtype = x.dtype
    latent = params["latent"]
    assert latent.shape[0] == 1, "kernel specialized for latent_len == 1"

    # ---- fold scale * latent query into the K projection (wrapper, f32) ----
    q = (latent.astype(f32) @ params["wq"].astype(f32)
         + params["bq"].astype(f32)) * (Dh ** -0.5)             # (1, C)
    head_of = jnp.arange(C, dtype=jnp.int32) // Dh
    exp_mat = (jnp.arange(H, dtype=jnp.int32)[:, None]
               == head_of[None, :]).astype(f32)                 # (H, C) one-hot
    qred = q.reshape(C, 1) * exp_mat.T                          # (C, H)
    ws = params["wk"].astype(f32) @ qred                        # (C, H)
    bs = params["bk"].astype(f32) @ qred                        # (1, H)
    # V columns first: the big V slice stays at lane offset 0 (128-aligned);
    # only the small H-wide score slice is the unaligned one.
    wsv = jnp.concatenate([params["wv"].astype(f32), ws], 1).astype(mm_dtype)
    bsv = jnp.concatenate([params["bv"].astype(f32), bs], 1)    # (1, C+H) f32
    exp_mm = exp_mat.astype(mm_dtype)

    wproj = params["wproj"].astype(mm_dtype)
    wfc1 = params["wfc1"].astype(mm_dtype)
    wfc2 = params["wfc2"].astype(mm_dtype)
    bproj = params["bproj"].astype(f32)
    bfc1 = params["bfc1"].astype(f32)
    bfc2 = params["bfc2"].astype(f32)
    Hd_mlp = wfc1.shape[1]

    x_itemsize = jnp.dtype(x.dtype).itemsize
    if block_b is None or block_n is None:
        bb, bn = _choose_blocks(B, N, C, H, x_itemsize)
        block_b = bb if block_b is None else block_b
        block_n = bn if block_n is None else block_n
    assert B % block_b == 0 and N % block_n == 0
    nb, nn = B // block_b, N // block_n

    single = _single_buffer_consts_supported()

    def const_spec(arr):
        # Full-array block, constant index map: DMA'd once; single-buffered
        # when the installed jax supports pipeline_mode.
        nd = arr.ndim
        kw = dict(pipeline_mode=pl.Buffered(1)) if single else {}
        return pl.BlockSpec(arr.shape, lambda *_: (0,) * nd, **kw)

    # ---- Kernel A: attention pooling --------------------------------------
    grid_a = pltpu.PrefetchScalarGridSpec(
        num_scalar_prefetch=0,
        grid=(nb, nn),
        in_specs=[
            pl.BlockSpec((block_b, block_n, C), lambda b, n: (b, n, 0)),
            const_spec(wsv), const_spec(bsv), const_spec(exp_mm),
        ],
        out_specs=pl.BlockSpec((block_b, C), lambda b, n: (b, 0)),
        scratch_shapes=[
            pltpu.VMEM((block_b, H), jnp.float32),   # running max
            pltpu.VMEM((block_b, H), jnp.float32),   # running denominator
            pltpu.VMEM((block_b, C), jnp.float32),   # running weighted sum
        ])
    vmem_a = _vmem_limit(_vmem_estimate_attn(block_b, block_n, C, H,
                                             x_itemsize))
    pooled = pl.pallas_call(
        _attn_pool_kernel,
        out_shape=jax.ShapeDtypeStruct((B, C), jnp.float32),
        grid_spec=grid_a,
        compiler_params=pltpu.CompilerParams(
            dimension_semantics=("parallel", "arbitrary"),
            vmem_limit_bytes=vmem_a),
    )(x, wsv, bsv, exp_mm)

    # ---- Kernel B: proj + residual MLP over the pooled (B, C) matrix -------
    rb = _pick_row_block(B)
    vmem_b = _vmem_limit(_vmem_estimate_mlp(rb, C, Hd_mlp))
    out = pl.pallas_call(
        _proj_mlp_kernel,
        out_shape=jax.ShapeDtypeStruct((B, C), out_dtype),
        grid=(B // rb,),
        in_specs=[
            pl.BlockSpec((rb, C), lambda i: (i, 0)),
            const_spec(wproj), const_spec(bproj),
            const_spec(wfc1), const_spec(bfc1),
            const_spec(wfc2), const_spec(bfc2),
        ],
        out_specs=pl.BlockSpec((rb, C), lambda i: (i, 0)),
        compiler_params=pltpu.CompilerParams(
            dimension_semantics=("parallel",),
            vmem_limit_bytes=vmem_b),
    )(pooled, wproj, bproj, wfc1, bfc1, wfc2, bfc2)

    # pool_type == 'token' with latent_len == 1: pooled row IS the output.
    return out


# ----------------------------------------------------------------------------
# Pure-JAX reference + parameter construction + smoke test.
# ----------------------------------------------------------------------------
def reference_forward(x, params, *, num_heads):
    """Pure-JAX reference mirroring the PyTorch forward (default config)."""
    B, N, C = x.shape
    H = num_heads
    Dh = C // H
    L = params["latent"].shape[0]
    scale = Dh ** -0.5
    q_latent = jnp.broadcast_to(params["latent"][None], (B, L, C))
    q = (q_latent @ params["wq"] + params["bq"]).reshape(B, L, H, Dh).transpose(0, 2, 1, 3)
    k = (x @ params["wk"] + params["bk"]).reshape(B, N, H, Dh).transpose(0, 2, 1, 3)
    v = (x @ params["wv"] + params["bv"]).reshape(B, N, H, Dh).transpose(0, 2, 1, 3)
    s = jnp.einsum("bhld,bhnd->bhln", q, k) * scale
    p = jax.nn.softmax(s, axis=-1)
    o = jnp.einsum("bhln,bhnd->bhld", p, v).transpose(0, 2, 1, 3).reshape(B, L, C)
    y = o @ params["wproj"] + params["bproj"]
    h = jax.nn.gelu(y @ params["wfc1"] + params["bfc1"], approximate=False)
    y = y + (h @ params["wfc2"] + params["bfc2"])
    return y[:, 0]


def make_params(key, C, hidden, latent_len):
    ks = jax.random.split(key, 16)
    std = 0.02
    return {
        # trunc-normal(std=latent_dim**-0.5) init of the latent query
        "latent": jax.random.normal(ks[0], (latent_len, C), jnp.float32) * (C ** -0.5),
        "wq": jax.random.normal(ks[1], (C, C), jnp.float32) * std,
        "bq": jax.random.normal(ks[2], (1, C), jnp.float32) * std,
        # kv = ColumnParallelLinear(C, 2C); cols [0:C] -> K, cols [C:2C] -> V
        "wk": jax.random.normal(ks[3], (C, C), jnp.float32) * std,
        "bk": jax.random.normal(ks[4], (1, C), jnp.float32) * std,
        "wv": jax.random.normal(ks[5], (C, C), jnp.float32) * std,
        "bv": jax.random.normal(ks[6], (1, C), jnp.float32) * std,
        "wproj": jax.random.normal(ks[7], (C, C), jnp.float32) * std,
        "bproj": jax.random.normal(ks[8], (1, C), jnp.float32) * std,
        "wfc1": jax.random.normal(ks[9], (C, hidden), jnp.float32) * std,
        "bfc1": jax.random.normal(ks[10], (1, hidden), jnp.float32) * std,
        "wfc2": jax.random.normal(ks[11], (hidden, C), jnp.float32) * std,
        "bfc2": jax.random.normal(ks[12], (1, C), jnp.float32) * std,
    }


if __name__ == "__main__":
    # Small shapes consistent with the module: embed_dim=64, 8 heads (head_dim
    # 8), mlp hidden 256, batch 16, sequence 16.
    B, N, C = 16, 16, 64
    num_heads = 8
    latent_len = 1
    hidden = int(C * 4.0)

    key = jax.random.PRNGKey(0)
    kx, kp = jax.random.split(key)
    x = jax.random.normal(kx, (B, N, C), jnp.float32)
    params = make_params(kp, C, hidden, latent_len)

    # block_b=8, block_n=8 -> attention grid (2, 2): exercises both the
    # megacore-splittable batch axis and the flash-style running-softmax N
    # axis (2 chunks).  The default block picker works too.
    out = attention_pool_latent(x, params, num_heads=num_heads,
                                block_b=8, block_n=8)
    out = jax.block_until_ready(out)

    ref = reference_forward(x, params, num_heads=num_heads)
    assert out.shape == (B, C), out.shape
    max_err = float(jnp.max(jnp.abs(out - ref)))
    assert jnp.allclose(out, ref, rtol=1e-2, atol=1e-2), max_err

    print("KERNEL_OK")
</pallas_src>

<mosaic_0001>
module attributes {stable_mosaic.version = 11 : i64} {
  func.func @_copy(%arg0: i32, %arg1: memref<8x128xf32, #tpu.memory_space<vmem>>, %arg2: memref<8x128xf32, #tpu.memory_space<vmem>>) attributes {dimension_semantics = [#tpu.dimension_semantics<arbitrary>], iteration_bounds = array<i64: 1>, scalar_prefetch = 0 : i64, scratch_operands = 0 : i64, tpu.core_type = #tpu.core_type<tc>, window_params = [{pipeline_mode = #tpu.pipeline_mode<synchronous>, transform_indices = @transform_0, window_bounds = array<i64: 8, 128>}, {pipeline_mode = #tpu.pipeline_mode<synchronous>, transform_indices = @transform_1, window_bounds = array<i64: 8, 128>}]} {
    %c0 = arith.constant 0 : index
    %c0_0 = arith.constant 0 : index
    %0 = vector.load %arg1[%c0, %c0_0] : memref<8x128xf32, #tpu.memory_space<vmem>>, vector<8x128xf32>
    %c0_1 = arith.constant 0 : index
    %c0_2 = arith.constant 0 : index
    %1 = vector.load %arg2[%c0_1, %c0_2] : memref<8x128xf32, #tpu.memory_space<vmem>>, vector<8x128xf32>
    tpu.vector_store %arg2[%c0_1, %c0_2], %0 {strides = array<i32>} : memref<8x128xf32, #tpu.memory_space<vmem>>, vector<8x128xf32>,
    return
  }
  func.func @transform_0(%arg0: i32) -> (i32, i32) {
    %c0_i32 = arith.constant 0 : i32
    %c0_i32_0 = arith.constant 0 : i32
    %c0_i32_1 = arith.constant 0 : i32
    return %c0_i32, %c0_i32_0 : i32, i32
  }
  func.func @transform_1(%arg0: i32) -> (i32, i32) {
    %c0_i32 = arith.constant 0 : i32
    %c0_i32_0 = arith.constant 0 : i32
    %c0_i32_1 = arith.constant 0 : i32
    return %c0_i32, %c0_i32_0 : i32, i32
  }
}

module attributes {stable_mosaic.version = 11 : i64} {
  func.func @_attn_pool_kernel(%arg0: i32, %arg1: i32, %arg2: memref<8x8x64xf32, #tpu.memory_space<vmem>>, %arg3: memref<64x72xbf16, #tpu.memory_space<vmem>>, %arg4: memref<1x72xf32, #tpu.memory_space<vmem>>, %arg5: memref<8x64xbf16, #tpu.memory_space<vmem>>, %arg6: memref<8x64xf32, #tpu.memory_space<vmem>>, %arg7: memref<8x8xf32, #tpu.memory_space<vmem>>, %arg8: memref<8x8xf32, #tpu.memory_space<vmem>>, %arg9: memref<8x64xf32, #tpu.memory_space<vmem>>) attributes {dimension_semantics = [#tpu.dimension_semantics<parallel>, #tpu.dimension_semantics<arbitrary>], iteration_bounds = array<i64: 2, 2>, scalar_prefetch = 0 : i64, scratch_operands = 3 : i64, tpu.core_type = #tpu.core_type<tc>, window_params = [{transform_indices = @transform_0, window_bounds = array<i64: 8, 8, 64>}, {pipeline_mode = #tpu.pipeline_mode<synchronous>, transform_indices = @transform_1, window_bounds = array<i64: 64, 72>}, {pipeline_mode = #tpu.pipeline_mode<synchronous>, transform_indices = @transform_2, window_bounds = array<i64: 1, 72>}, {pipeline_mode = #tpu.pipeline_mode<synchronous>, transform_indices = @transform_3, window_bounds = array<i64: 8, 64>}, {transform_indices = @transform_4, window_bounds = array<i64: 8, 64>}]} {
    %c0_i32 = arith.constant 0 : i32
    %0 = arith.cmpi eq, %arg1, %c0_i32 : i32
    %1 = arith.extui %0 : i1 to i32
    %c0_i32_0 = arith.constant 0 : i32
    %2 = arith.cmpi ne, %1, %c0_i32_0 : i32
    scf.if %2 {
      %cst_29 = arith.constant 0xFF800000 : f32
      %46 = vector.broadcast %cst_29 : f32 to vector<8x8xf32>
      %c0_30 = arith.constant 0 : index
      %c0_31 = arith.constant 0 : index
      %47 = vector.load %arg7[%c0_30, %c0_31] : memref<8x8xf32, #tpu.memory_space<vmem>>, vector<8x8xf32>
      tpu.vector_store %arg7[%c0_30, %c0_31], %46 {strides = array<i32>} : memref<8x8xf32, #tpu.memory_space<vmem>>, vector<8x8xf32>,
      %cst_32 = arith.constant 0.000000e+00 : f32
      %48 = vector.broadcast %cst_32 : f32 to vector<8x8xf32>
      %c0_33 = arith.constant 0 : index
      %c0_34 = arith.constant 0 : index
      %49 = vector.load %arg8[%c0_33, %c0_34] : memref<8x8xf32, #tpu.memory_space<vmem>>, vector<8x8xf32>
      tpu.vector_store %arg8[%c0_33, %c0_34], %48 {strides = array<i32>} : memref<8x8xf32, #tpu.memory_space<vmem>>, vector<8x8xf32>,
      %cst_35 = arith.constant 0.000000e+00 : f32
      %50 = vector.broadcast %cst_35 : f32 to vector<8x64xf32>
      %c0_36 = arith.constant 0 : index
      %c0_37 = arith.constant 0 : index
      %51 = vector.load %arg9[%c0_36, %c0_37] : memref<8x64xf32, #tpu.memory_space<vmem>>, vector<8x64xf32>
      tpu.vector_store %arg9[%c0_36, %c0_37], %50 {strides = array<i32>} : memref<8x64xf32, #tpu.memory_space<vmem>>, vector<8x64xf32>,
    } else {
    }
    %c0 = arith.constant 0 : index
    %c0_1 = arith.constant 0 : index
    %c0_2 = arith.constant 0 : index
    %3 = vector.load %arg2[%c0, %c0_1, %c0_2] : memref<8x8x64xf32, #tpu.memory_space<vmem>>, vector<8x8x64xf32>
    %4 = arith.truncf %3 : vector<8x8x64xf32> to vector<8x8x64xbf16>
    %5 = vector.shape_cast %4 : vector<8x8x64xbf16> to vector<64x64xbf16>
    %c0_3 = arith.constant 0 : index
    %c0_4 = arith.constant 0 : index
    %6 = vector.load %arg3[%c0_3, %c0_4] : memref<64x72xbf16, #tpu.memory_space<vmem>>, vector<64x72xbf16>
    %cst = arith.constant dense<0.000000e+00> : vector<64x72xf32>
    %7 = tpu.matmul %5, %6, %cst {dimension_numbers = #tpu.dot_dimension_numbers<[1], [0], [0], [1], [0, 0, 1, 1], [], []>} : vector<64x64xbf16>, vector<64x72xbf16>, vector<64x72xf32> -> vector<64x72xf32>
    %c0_5 = arith.constant 0 : index
    %c0_6 = arith.constant 0 : index
    %8 = vector.load %arg4[%c0_5, %c0_6] : memref<1x72xf32, #tpu.memory_space<vmem>>, vector<1x72xf32>
    %9 = vector.broadcast %8 : vector<1x72xf32> to vector<64x72xf32>
    %10 = arith.addf %7, %9 : vector<64x72xf32>
    %11 = vector.extract_strided_slice %10 {offsets = [0, 0], sizes = [64, 64], strides = [1, 1]} : vector<64x72xf32> to vector<64x64xf32>
    %12 = vector.extract_strided_slice %10 {offsets = [0, 64], sizes = [64, 8], strides = [1, 1]} : vector<64x72xf32> to vector<64x8xf32>
    %13 = vector.shape_cast %12 : vector<64x8xf32> to vector<8x8x8xf32>
    %c0_7 = arith.constant 0 : index
    %c0_8 = arith.constant 0 : index
    %14 = vector.load %arg7[%c0_7, %c0_8] : memref<8x8xf32, #tpu.memory_space<vmem>>, vector<8x8xf32>
    %cst_9 = arith.constant dense<0xFF800000> : vector<8x8xf32>
    %15 = vector.multi_reduction <maximumf>, %13, %cst_9 [1] : vector<8x8x8xf32> to vector<8x8xf32>
    %16 = arith.maximumf %14, %15 : vector<8x8xf32>
    %17 = arith.subf %14, %16 : vector<8x8xf32>
    %18 = math.exp %17 : vector<8x8xf32>
    %19 = vector.shape_cast %16 : vector<8x8xf32> to vector<8x1x8xf32>
    %20 = vector.broadcast %19 : vector<8x1x8xf32> to vector<8x8x8xf32>
    %21 = arith.subf %13, %20 : vector<8x8x8xf32>
    %22 = math.exp %21 : vector<8x8x8xf32>
    %c0_10 = arith.constant 0 : index
    %c0_11 = arith.constant 0 : index
    %23 = vector.load %arg8[%c0_10, %c0_11] : memref<8x8xf32, #tpu.memory_space<vmem>>, vector<8x8xf32>
    %24 = arith.mulf %18, %23 : vector<8x8xf32>
    %cst_12 = arith.constant dense<0.000000e+00> : vector<8x8xf32>
    %25 = vector.multi_reduction <add>, %22, %cst_12 [1] : vector<8x8x8xf32> to vector<8x8xf32>
    %26 = arith.addf %24, %25 : vector<8x8xf32>
    %c0_13 = arith.constant 0 : index
    %c0_14 = arith.constant 0 : index
    %27 = vector.load %arg8[%c0_13, %c0_14] : memref<8x8xf32, #tpu.memory_space<vmem>>, vector<8x8xf32>
    tpu.vector_store %arg8[%c0_13, %c0_14], %26 {strides = array<i32>} : memref<8x8xf32, #tpu.memory_space<vmem>>, vector<8x8xf32>,
    %28 = vector.shape_cast %22 : vector<8x8x8xf32> to vector<64x8xf32>
    %29 = arith.truncf %28 : vector<64x8xf32> to vector<64x8xbf16>
    %c0_15 = arith.constant 0 : index
    %c0_16 = arith.constant 0 : index
    %30 = vector.load %arg5[%c0_15, %c0_16] : memref<8x64xbf16, #tpu.memory_space<vmem>>, vector<8x64xbf16>
    %cst_17 = arith.constant dense<0.000000e+00> : vector<64x64xf32>
    %31 = tpu.matmul %29, %30, %cst_17 {dimension_numbers = #tpu.dot_dimension_numbers<[1], [0], [0], [1], [0, 0, 1, 1], [], []>} : vector<64x8xbf16>, vector<8x64xbf16>, vector<64x64xf32> -> vector<64x64xf32>
    %32 = arith.truncf %18 : vector<8x8xf32> to vector<8x8xbf16>
    %c0_18 = arith.constant 0 : index
    %c0_19 = arith.constant 0 : index
    %33 = vector.load %arg5[%c0_18, %c0_19] : memref<8x64xbf16, #tpu.memory_space<vmem>>, vector<8x64xbf16>
    %cst_20 = arith.constant dense<0.000000e+00> : vector<8x64xf32>
    %34 = tpu.matmul %32, %33, %cst_20 {dimension_numbers = #tpu.dot_dimension_numbers<[1], [0], [0], [1], [0, 0, 1, 1], [], []>} : vector<8x8xbf16>, vector<8x64xbf16>, vector<8x64xf32> -> vector<8x64xf32>
    %35 = arith.mulf %31, %11 : vector<64x64xf32>
    %36 = vector.shape_cast %35 : vector<64x64xf32> to vector<8x8x64xf32>
    %cst_21 = arith.constant dense<0.000000e+00> : vector<8x64xf32>
    %37 = vector.multi_reduction <add>, %36, %cst_21 [1] : vector<8x8x64xf32> to vector<8x64xf32>
    %c0_22 = arith.constant 0 : index
    %c0_23 = arith.constant 0 : index
    %38 = vector.load %arg9[%c0_22, %c0_23] : memref<8x64xf32, #tpu.memory_space<vmem>>, vector<8x64xf32>
    %39 = arith.mulf %34, %38 : vector<8x64xf32>
    %40 = arith.addf %39, %37 : vector<8x64xf32>
    %c0_24 = arith.constant 0 : index
    %c0_25 = arith.constant 0 : index
    %41 = vector.load %arg9[%c0_24, %c0_25] : memref<8x64xf32, #tpu.memory_space<vmem>>, vector<8x64xf32>
    tpu.vector_store %arg9[%c0_24, %c0_25], %40 {strides = array<i32>} : memref<8x64xf32, #tpu.memory_space<vmem>>, vector<8x64xf32>,
    %c0_26 = arith.constant 0 : index
    %c0_27 = arith.constant 0 : index
    %42 = vector.load %arg7[%c0_26, %c0_27] : memref<8x8xf32, #tpu.memory_space<vmem>>, vector<8x8xf32>
    tpu.vector_store %arg7[%c0_26, %c0_27], %16 {strides = array<i32>} : memref<8x8xf32, #tpu.memory_space<vmem>>, vector<8x8xf32>,
    %c1_i32 = arith.constant 1 : i32
    %43 = arith.cmpi eq, %arg1, %c1_i32 : i32
    %44 = arith.extui %43 : i1 to i32
    %c0_i32_28 = arith.constant 0 : i32
    %45 = arith.cmpi ne, %44, %c0_i32_28 : i32
    scf.if %45 {
      %c0_29 = arith.constant 0 : index
      %c0_30 = arith.constant 0 : index
      %46 = vector.load %arg8[%c0_29, %c0_30] : memref<8x8xf32, #tpu.memory_space<vmem>>, vector<8x8xf32>
      %47 = tpu.reciprocal %46 {approx = true} : vector<8x8xf32> -> vector<8x8xf32>
      %48 = arith.truncf %47 : vector<8x8xf32> to vector<8x8xbf16>
      %c0_31 = arith.constant 0 : index
      %c0_32 = arith.constant 0 : index
      %49 = vector.load %arg5[%c0_31, %c0_32] : memref<8x64xbf16, #tpu.memory_space<vmem>>, vector<8x64xbf16>
      %cst_33 = arith.constant dense<0.000000e+00> : vector<8x64xf32>
      %50 = tpu.matmul %48, %49, %cst_33 {dimension_numbers = #tpu.dot_dimension_numbers<[1], [0], [0], [1], [0, 0, 1, 1], [], []>} : vector<8x8xbf16>, vector<8x64xbf16>, vector<8x64xf32> -> vector<8x64xf32>
      %c0_34 = arith.constant 0 : index
      %c0_35 = arith.constant 0 : index
      %51 = vector.load %arg9[%c0_34, %c0_35] : memref<8x64xf32, #tpu.memory_space<vmem>>, vector<8x64xf32>
      %52 = arith.mulf %51, %50 : vector<8x64xf32>
      %c0_36 = arith.constant 0 : index
      %c0_37 = arith.constant 0 : index
      %53 = vector.load %arg6[%c0_36, %c0_37] : memref<8x64xf32, #tpu.memory_space<vmem>>, vector<8x64xf32>
      tpu.vector_store %arg6[%c0_36, %c0_37], %52 {strides = array<i32>} : memref<8x64xf32, #tpu.memory_space<vmem>>, vector<8x64xf32>,
    } else {
    }
    return
  }
  func.func @transform_0(%arg0: i32, %arg1: i32) -> (i32, i32, i32) {
    %c0_i32 = arith.constant 0 : i32
    %c0_i32_0 = arith.constant 0 : i32
    return %arg0, %arg1, %c0_i32 : i32, i32, i32
  }
  func.func @transform_1(%arg0: i32, %arg1: i32) -> (i32, i32) {
    %c0_i32 = arith.constant 0 : i32
    %c0_i32_0 = arith.constant 0 : i32
    %c0_i32_1 = arith.constant 0 : i32
    return %c0_i32, %c0_i32_0 : i32, i32
  }
  func.func @transform_2(%arg0: i32, %arg1: i32) -> (i32, i32) {
    %c0_i32 = arith.constant 0 : i32
    %c0_i32_0 = arith.constant 0 : i32
    %c0_i32_1 = arith.constant 0 : i32
    return %c0_i32, %c0_i32_0 : i32, i32
  }
  func.func @transform_3(%arg0: i32, %arg1: i32) -> (i32, i32) {
    %c0_i32 = arith.constant 0 : i32
    %c0_i32_0 = arith.constant 0 : i32
    %c0_i32_1 = arith.constant 0 : i32
    return %c0_i32, %c0_i32_0 : i32, i32
  }
  func.func @transform_4(%arg0: i32, %arg1: i32) -> (i32, i32) {
    %c0_i32 = arith.constant 0 : i32
    %c0_i32_0 = arith.constant 0 : i32
    return %arg0, %c0_i32 : i32, i32
  }
}

</mosaic_0001>

<llo_original>
// kernel: tpu_custom_call.1
$region0: #{tpu_custom_call.1}
  #allocation0 [shape = 'u32[]', space=smem, size = 0x4, offset = 0x4, fixed_abs, tag = 'smem constant byte address 0x4 - core index']
  #allocation1 [shape = 'u32[72,128]{1,0:T(1,128)}', space=vmem, size = 0x9000, scoped, tag = 'internal scratch']
  %s0 = inlined_call_operand.hbm [shape: f32[8,128], index: 0, kind: input, shape index: {}]
  %s1 = inlined_call_operand.hbm [shape: f32[8,128], index: 1, kind: output, shape index: {}]
  %s2 = sld [smem:[#allocation0]]
  $region18: #{tpu_custom_call.1} parent=0
    _
  %s4 = ssub.s32 1, %s2
  %s5 = scalar_select 0, %s4, %s2
  $region1: #{tpu_custom_call.1} parent=0
    #allocation2 [shape = 'u8[4096]{0}', space=vmem, size = 0x1000, scoped, tag = 'input window, operand 0, single buffered']
    #allocation3 [shape = 's32[1]{0}', space=sflag, size = 0x4, scoped, tag = 'scoped memory for tpu_custom_call.1']
    #allocation4 [shape = 's32[1]{0}', space=sflag, size = 0x4, scoped, tag = 'scoped memory for tpu_custom_call.1']
    #allocation5 [shape = 'u8[4096]{0}', space=vmem, size = 0x1000, scoped, tag = 'output window, operand 0, single buffered']
    %6 = vsyncpa [#allocation3], 0
    %7 = vsyncpa [#allocation4], 0
    // Predicated region
    $region2: #{tpu_custom_call.1} parent=1 // pred_check
      _
    $region3: #{tpu_custom_call.1} parent=1 // pred_check_branch
      %9 = sbr.rel (0) target = $region5
    $region4: #{tpu_custom_call.1} parent=1 // pred_region
      %11 = vsyncadd [#allocation3], 0
      %s13 = sshll.u32 %s0, 4
      %s14 = int_to_ptr.hbm [resolvable:$true] %s13
      %s15 = sshll.u32 [#allocation2], 4
      %s16 = int_to_ptr.vmem [resolvable:$true] %s15
      %18 = dma.hbm_to_vmem [thread:$0]  %s14, 128, %s16, [#allocation3]
    $region5: #{tpu_custom_call.1} parent=1 // pred_fallthru
      _
    // Predicated region
    $region6: #{tpu_custom_call.1} parent=1 // pred_check
      _
    $region7: #{tpu_custom_call.1} parent=1 // pred_check_branch
      %20 = sbr.rel (0) target = $region9
    $region8: #{tpu_custom_call.1} parent=1 // pred_region
      %22 = dma.done [#allocation3], 128
    $region9: #{tpu_custom_call.1} parent=1 // pred_fallthru
      _
    %v23 = vld [vmem:[#allocation2] sm:$0xff]
    %24 = vst [vmem:[#allocation5] sm:$0xff] %v23
    // Predicated region
    $region10: #{tpu_custom_call.1} parent=1 // pred_check
      _
    $region11: #{tpu_custom_call.1} parent=1 // pred_check_branch
      %26 = sbr.rel (0) target = $region13
    $region12: #{tpu_custom_call.1} parent=1 // pred_region
      %28 = vsyncadd [#allocation4], 0
      %s30 = sshll.u32 [#allocation5], 4
      %s31 = int_to_ptr.vmem [resolvable:$true] %s30
      %s32 = sshll.u32 %s1, 4
      %s33 = int_to_ptr.hbm [resolvable:$true] %s32
      %35 = dma.vmem_to_hbm [thread:$0]  %s31, 128, %s33, [#allocation4]
    $region13: #{tpu_custom_call.1} parent=1 // pred_fallthru
      _
    // Predicated region
    $region14: #{tpu_custom_call.1} parent=1 // pred_check
      _
    $region15: #{tpu_custom_call.1} parent=1 // pred_check_branch
      %37 = sbr.rel (0) target = $region17
    $region16: #{tpu_custom_call.1} parent=1 // pred_region
      %39 = dma.done [#allocation4], 128
    $region17: #{tpu_custom_call.1} parent=1 // pred_fallthru
      _
    %40 = vsyncpa [#allocation3], 1
    %41 = vsyncpa [#allocation4], 1

// kernel: tpu_custom_call.1
$region0: #{tpu_custom_call.1}
  #allocation0 [shape = 'u32[]', space=smem, size = 0x4, offset = 0x4, fixed_abs, tag = 'smem constant byte address 0x4 - core index']
  #allocation1 [shape = 'u32[72,128]{1,0:T(1,128)}', space=vmem, size = 0x9000, scoped, tag = 'internal scratch']
  #allocation2 [shape = 'f32[8,8]{1,0:T(8,128)}', space=vmem, size = 0x1000, scoped, tag = 'scratch operand']
  #allocation3 [shape = 'f32[8,8]{1,0:T(8,128)}', space=vmem, size = 0x1000, scoped, tag = 'scratch operand']
  #allocation4 [shape = 'f32[8,64]{1,0:T(8,128)}', space=vmem, size = 0x1000, scoped, tag = 'scratch operand']
  %s0 = inlined_call_operand.hbm [shape: f32[16,16,64], index: 0, kind: input, shape index: {}]
  %s1 = inlined_call_operand.hbm [shape: bf16[64,72], index: 1, kind: input, shape index: {}]
  %s2 = inlined_call_operand.vmem [shape: f32[1,72], index: 2, kind: input, shape index: {}]
  %s3 = inlined_call_operand.hbm [shape: bf16[8,64], index: 3, kind: input, shape index: {}]
  %s4 = inlined_call_operand.hbm [shape: f32[16,64], index: 4, kind: output, shape index: {}]
  %s5 = sld [smem:[#allocation0]]
  $region69: #{tpu_custom_call.1} parent=0
    _
  %s7 = ssub.s32 1, %s5
  %s8 = scalar_select 0, %s7, %s5
  $region1: #{tpu_custom_call.1} parent=0
    #allocation5 [shape = 'u8[65536]{0}', space=vmem, size = 0x10000, scoped, tag = 'input window, operand 0']
    #allocation6 [shape = 's32[2]{0}', space=sflag, size = 0x8, scoped, tag = 'scoped memory for tpu_custom_call.1']
    #allocation7 [shape = 's32[2]{0}', space=sflag, size = 0x8, scoped, tag = 'scoped memory for tpu_custom_call.1']
    #allocation8 [shape = 'u8[16384]{0}', space=vmem, size = 0x4000, scoped, tag = 'input window, operand 1, single buffered']
    #allocation9 [shape = 's32[1]{0}', space=sflag, size = 0x4, scoped, tag = 'scoped memory for tpu_custom_call.1']
    #allocation10 [shape = 'u8[2048]{0}', space=vmem, size = 0x800, scoped, tag = 'input window, operand 3, single buffered']
    #allocation11 [shape = 'u8[8192]{0}', space=vmem, size = 0x2000, scoped, tag = 'output window, operand 0']
    %9 = vsyncpa [#allocation6], 0
    %s10 = scalar_lea.sflag [#allocation6], 1
    %11 = vsyncpa %s10, 0
    %12 = vsyncpa [#allocation9], 0
    %13 = vsyncpa [#allocation7], 0
    %s14 = scalar_lea.sflag [#allocation7], 1
    %15 = vsyncpa %s14, 0
    loop: start=0, step=1, limit=6
    $region2: #{tpu_custom_call.1} parent=1 // loop_pre_header
      _
    $region3: #{tpu_custom_call.1} parent=1 // loop_header
      %s17 = sphi 0, %s21
      %p18 = scmp.ge.s32.totalorder %s17, 6
      %s24 = sphi 0, %s36
      %s25 = sphi 0, %s32
      %s26 = sphi 0, %s24
      %s27 = sphi 0, %s25
      %s28 = sphi 0, %s26
      %s29 = sphi 0, %s27
      %s41 = sphi 0, %s43
      %s44 = sphi 0, %s41
      %s45 = sphi 0, %s44
      %s61 = sphi 0, %s45
      %s65 = sphi 0, %s65
      %s67 = sphi 0, %s65
      %s68 = sphi 0, %s67
      %s82 = sphi 0, %s68
      %s86 = sphi 0, %s86
      %s88 = sphi 0, %s86
      %s89 = sphi 0, %s88
      %s103 = sphi 0, %s89
      %s107 = sphi 0, %s107
      %s109 = sphi 0, %s107
      %s110 = sphi 0, %s109
      %s124 = sphi 0, %s110
      %s130 = sphi 0, %s132
      %s133 = sphi 0, %s130
      %s134 = sphi 0, %s133
      %s150 = sphi 0, %s134
    $region4: #{tpu_custom_call.1} parent=1 // loop_header_branch
      %20 = sbr.rel (%p18) target = $region8
    $region5: #{tpu_custom_call.1} parent=1 // loop_body
      %s22 = ssub.s32 %s17, 1
      %s23 = ssub.s32 %s17, 2
      %s30 = sadd.s32 1, %s25
      %p31 = scmp.ge.s32.totalorder %s30, 2
      %s32 = scalar_select %p31, 0, %s30
      %s33 = sadd.s32 1, %s24
      %s34 = scalar_select %p31, %s33, %s24
      %p35 = scmp.ge.s32.totalorder %s34, 2
      %s36 = scalar_select %p35, 0, %s34
      %s37 = ssub.s32 %s24, %s36
      %s38 = ssub.s32 %s25, %s32
      %s39 = sor.u32 %s37, %s38
      %p40 = scmp.eq.s32.totalorder %s39, 0
      %s42 = sadd.s32 %s41, 1
      %s43 = scalar_select %p40, %s41, %s42
      %p46 = pneg %p40
      %p47 = scmp.eq.s32.totalorder %s17, 3
      %p48 = por %p46, %p47
      %p49 = scmp.ne.s32.totalorder %s41, %s44
      %p50 = scmp.eq.s32.totalorder %s17, 0
      %p51 = por %p49, %p50
      %p52 = scmp.ne.s32.totalorder %s41, %s44
      %p53 = scmp.eq.s32.totalorder %s22, 3
      %p54 = por %p52, %p53
      %p55 = scmp.ne.s32.totalorder %s44, %s45
      %p56 = scmp.eq.s32.totalorder %s22, 0
      %p57 = por %p55, %p56
      %p58 = scmp.ne.s32.totalorder %s44, %s45
      %p59 = scmp.eq.s32.totalorder %s23, 3
      %p60 = por %p58, %p59
      %p62 = scmp.ne.s32.totalorder %s45, %s61
      %p63 = scmp.eq.s32.totalorder %s23, 0
      %p64 = por %p62, %p63
      %s66 = sadd.s32 %s65, 1
      %p69 = scmp.eq.s32.totalorder %s17, 3
      %p70 = scmp.ne.s32.totalorder %s65, %s67
      %p71 = scmp.eq.s32.totalorder %s17, 0
      %p72 = por %p70, %p71
      %p73 = scmp.ne.s32.totalorder %s65, %s67
      %p74 = scmp.eq.s32.totalorder %s22, 3
      %p75 = por %p73, %p74
      %p76 = scmp.ne.s32.totalorder %s67, %s68
      %p77 = scmp.eq.s32.totalorder %s22, 0
      %p78 = por %p76, %p77
      %p79 = scmp.ne.s32.totalorder %s67, %s68
      %p80 = scmp.eq.s32.totalorder %s23, 3
      %p81 = por %p79, %p80
      %p83 = scmp.ne.s32.totalorder %s68, %s82
      %p84 = scmp.eq.s32.totalorder %s23, 0
      %p85 = por %p83, %p84
      %s87 = sadd.s32 %s86, 1
      %p90 = scmp.eq.s32.totalorder %s17, 3
      %p91 = scmp.ne.s32.totalorder %s86, %s88
      %p92 = scmp.eq.s32.totalorder %s17, 0
      %p93 = por %p91, %p92
      %p94 = scmp.ne.s32.totalorder %s86, %s88
      %p95 = scmp.eq.s32.totalorder %s22, 3
      %p96 = por %p94, %p95
      %p97 = scmp.ne.s32.totalorder %s88, %s89
      %p98 = scmp.eq.s32.totalorder %s22, 0
      %p99 = por %p97, %p98
      %p100 = scmp.ne.s32.totalorder %s88, %s89
      %p101 = scmp.eq.s32.totalorder %s23, 3
      %p102 = por %p100, %p101
      %p104 = scmp.ne.s32.totalorder %s89, %s103
      %p105 = scmp.eq.s32.totalorder %s23, 0
      %p106 = por %p104, %p105
      %s108 = sadd.s32 %s107, 1
      %p111 = scmp.eq.s32.totalorder %s17, 3
      %p112 = scmp.ne.s32.totalorder %s107, %s109
      %p113 = scmp.eq.s32.totalorder %s17, 0
      %p114 = por %p112, %p113
      %p115 = scmp.ne.s32.totalorder %s107, %s109
      %p116 = scmp.eq.s32.totalorder %s22, 3
      %p117 = por %p115, %p116
      %p118 = scmp.ne.s32.totalorder %s109, %s110
      %p119 = scmp.eq.s32.totalorder %s22, 0
      %p120 = por %p118, %p119
      %p121 = scmp.ne.s32.totalorder %s109, %s110
      %p122 = scmp.eq.s32.totalorder %s23, 3
      %p123 = por %p121, %p122
      %p125 = scmp.ne.s32.totalorder %s110, %s124
      %p126 = scmp.eq.s32.totalorder %s23, 0
      %p127 = por %p125, %p126
      %s128 = ssub.s32 %s24, %s36
      %p129 = scmp.eq.s32.totalorder %s128, 0
      %s131 = sadd.s32 %s130, 1
      %s132 = scalar_select %p129, %s130, %s131
      %p135 = pneg %p129
      %p136 = scmp.eq.s32.totalorder %s17, 3
      %p137 = por %p135, %p136
      %p138 = scmp.ne.s32.totalorder %s130, %s133
      %p139 = scmp.eq.s32.totalorder %s17, 0
      %p140 = por %p138, %p139
      %p141 = scmp.ne.s32.totalorder %s130, %s133
      %p142 = scmp.eq.s32.totalorder %s22, 3
      %p143 = por %p141, %p142
      %p144 = scmp.ne.s32.totalorder %s133, %s134
      %p145 = scmp.eq.s32.totalorder %s22, 0
      %p146 = por %p144, %p145
      %p147 = scmp.ne.s32.totalorder %s133, %s134
      %p148 = scmp.eq.s32.totalorder %s23, 3
      %p149 = por %p147, %p148
      %p151 = scmp.ne.s32.totalorder %s134, %s150
      %p152 = scmp.eq.s32.totalorder %s23, 0
      %p153 = por %p151, %p152
      %p154 = scmp.le.s32.totalorder 1, %s17
      %p155 = scmp.lt.s32.totalorder %s17, 5
      %p156 = pnand %p154, %p155
      %p157 = pneg %p156
      // Predicated region
      $region9: #{tpu_custom_call.1} parent=5 // pred_check
        _
      $region10: #{tpu_custom_call.1} parent=5 // pred_check_branch
        %159 = sbr.rel (%p156) target = $region12
      $region11: #{tpu_custom_call.1} parent=5 // pred_region
        %s160 = ssub.s32 %s17, 1
        // Predicated region
        $region13: #{tpu_custom_call.1} parent=11 // pred_check
          %p161 = pneg %p78
        $region14: #{tpu_custom_call.1} parent=11 // pred_check_branch
          %163 = sbr.rel (%p161) target = $region16
        $region15: #{tpu_custom_call.1} parent=11 // pred_region
          %165 = vsyncadd [#allocation9], 0
          %s166 = sshll.u32 %s1, 4
          %s167 = int_to_ptr.hbm [resolvable:$true] %s166
          %s168 = sshll.u32 [#allocation8], 4
          %s169 = int_to_ptr.vmem [resolvable:$true] %s168
          %174 = dma.hbm_to_vmem [thread:$0]  %s167, 512, %s169, [#allocation9], 64, 64, 4
        $region16: #{tpu_custom_call.1} parent=11 // pred_fallthru
          _
        // Predicated region
        $region17: #{tpu_custom_call.1} parent=11 // pred_check
          %p175 = pneg %p99
        $region18: #{tpu_custom_call.1} parent=11 // pred_check_branch
          %177 = sbr.rel (%p175) target = $region20
        $region19: #{tpu_custom_call.1} parent=11 // pred_region
          _
        $region20: #{tpu_custom_call.1} parent=11 // pred_fallthru
          _
        // Predicated region
        $region21: #{tpu_custom_call.1} parent=11 // pred_check
          %p178 = pneg %p120
        $region22: #{tpu_custom_call.1} parent=11 // pred_check_branch
          %180 = sbr.rel (%p178) target = $region24
        $region23: #{tpu_custom_call.1} parent=11 // pred_region
          %182 = vsyncadd [#allocation9], 0
          %s184 = sshll.u32 %s3, 4
          %s185 = int_to_ptr.hbm [resolvable:$true] %s184
          %s186 = sshll.u32 [#allocation10], 4
          %s187 = int_to_ptr.vmem [resolvable:$true] %s186
          %189 = dma.hbm_to_vmem [thread:$0]  %s185, 64, %s187, [#allocation9]
        $region24: #{tpu_custom_call.1} parent=11 // pred_fallthru
          _
      $region12: #{tpu_custom_call.1} parent=5 // pred_fallthru
        _
      %p190 = scmp.lt.s32.totalorder %s17, 4
      // Predicated region
      $region25: #{tpu_custom_call.1} parent=5 // pred_check
        %p191 = pneg %p190
      $region26: #{tpu_custom_call.1} parent=5 // pred_check_branch
        %193 = sbr.rel (%p191) target = $region28
      $region27: #{tpu_custom_call.1} parent=5 // pred_region
        // Predicated region
        $region29: #{tpu_custom_call.1} parent=27 // pred_check
          %p194 = pneg %p51
        $region30: #{tpu_custom_call.1} parent=27 // pred_check_branch
          %196 = sbr.rel (%p194) target = $region32
        $region31: #{tpu_custom_call.1} parent=27 // pred_region
          %s197 = sand.u32 %s41, 1
          %s198 = scalar_lea.sflag [#allocation6], %s197
          %s199 = sand.u32 %s41, 1
          %s200 = smul.addr %s199, 64
          %s201 = scalar_lea.vmem [#allocation5], %s200
          %s202 = smul.u32 8, %s24
          %204 = vsyncadd %s198, 0
          %s205 = smul.addr %s202, 2
          %s206 = sadd.s32 %s25, %s205
          %s207 = smul.addr %s206, 8
          %s208 = scalar_lea.hbm %s0, %s207
          %s209 = sshll.u32 %s208, 4
          %s210 = int_to_ptr.hbm [resolvable:$true] %s209
          %s211 = sshll.u32 %s201, 4
          %s212 = int_to_ptr.vmem [resolvable:$true] %s211
          %217 = dma.hbm_to_vmem [thread:$0]  %s210, 1024, %s212, %s198, 256, 128, 8
        $region32: #{tpu_custom_call.1} parent=27 // pred_fallthru
          _
      $region28: #{tpu_custom_call.1} parent=5 // pred_fallthru
        _
      %p218 = scmp.le.s32.totalorder 1, %s17
      %p219 = scmp.lt.s32.totalorder %s17, 5
      %p220 = pnand %p218, %p219
      %p221 = pneg %p220
      // Predicated region
      $region33: #{tpu_custom_call.1} parent=5 // pred_check
        _
      $region34: #{tpu_custom_call.1} parent=5 // pred_check_branch
        %223 = sbr.rel (%p220) target = $region36
      $region35: #{tpu_custom_call.1} parent=5 // pred_region
        %s224 = ssub.s32 %s17, 1
        %s225 = sand.u32 %s44, 1
        %s226 = scalar_lea.sflag [#allocation6], %s225
        %s227 = sand.u32 %s44, 1
        %s228 = smul.addr %s227, 64
        %s229 = scalar_lea.vmem [#allocation5], %s228
        // Predicated region
        $region37: #{tpu_custom_call.1} parent=35 // pred_check
          %p230 = pneg %p57
        $region38: #{tpu_custom_call.1} parent=35 // pred_check_branch
          %232 = sbr.rel (%p230) target = $region40
        $region39: #{tpu_custom_call.1} parent=35 // pred_region
          %234 = dma.done %s226, 1024
        $region40: #{tpu_custom_call.1} parent=35 // pred_fallthru
          _
        // Predicated region
        $region41: #{tpu_custom_call.1} parent=35 // pred_check
          %p235 = pneg %p78
        $region42: #{tpu_custom_call.1} parent=35 // pred_check_branch
          %237 = sbr.rel (%p235) target = $region44
        $region43: #{tpu_custom_call.1} parent=35 // pred_region
          %239 = dma.done [#allocation9], 512
        $region44: #{tpu_custom_call.1} parent=35 // pred_fallthru
          _
        // Predicated region
        $region45: #{tpu_custom_call.1} parent=35 // pred_check
          %p240 = pneg %p120
        $region46: #{tpu_custom_call.1} parent=35 // pred_check_branch
          %242 = sbr.rel (%p240) target = $region48
        $region47: #{tpu_custom_call.1} parent=35 // pred_region
          %244 = dma.done [#allocation9], 64
        $region48: #{tpu_custom_call.1} parent=35 // pred_fallthru
          _
        %s245 = sand.u32 %s44, 1
        %s246 = scalar_lea.sflag [#allocation6], %s245
        %s247 = sand.u32 %s44, 1
        %s248 = smul.addr %s247, 64
        %s249 = scalar_lea.vmem [#allocation5], %s248
        %p250 = pneg %p57
        %p251 = pneg %p54
        %p252 = pneg %p78
        %p253 = pneg %p75
        %p254 = pneg %p99
        %p255 = pneg %p96
        %p256 = pneg %p120
        %p257 = pneg %p117
        %p258 = pneg %p146
        %p259 = pneg %p143
        %s260 = sand.u32 %s133, 1
        %s261 = scalar_lea.sflag [#allocation7], %s260
        %s262 = sand.u32 %s133, 1
        %s263 = smul.addr %s262, 8
        %s264 = scalar_lea.vmem [#allocation11], %s263
        %s265 = smul.u32 8, %s26
        %p267 = scmp.eq.s32.totalorder %s27, 0
        // Predicated region
        $region49: #{tpu_custom_call.1} parent=35 // pred_check
          %p268 = pneg %p267
        $region50: #{tpu_custom_call.1} parent=35 // pred_check_branch
          %270 = sbr.rel (%p268) target = $region52
        $region51: #{tpu_custom_call.1} parent=35 // pred_region
          %vm271 = vcmask 64512
          %272 = vst.msk [vmem:[#allocation2] sm:$0xff] %vm271, -inf
          %273 = vst.msk [vmem:[#allocation3] sm:$0xff] %vm271, 0.0
          %vm274 = vcmask 523264
          %275 = vst.msk [vmem:[#allocation4] sm:$0xff] %vm274, 0.0
        $region52: #{tpu_custom_call.1} parent=35 // pred_fallthru
          _
        %v276 = vld [vmem:[%s229] sm:$0xff]
        %v277 = vld [vmem:[%s229 + $0x8] sm:$0xff]
        %v278 = vld [vmem:[%s229 + $0x10] sm:$0xff]
        %v279 = vld [vmem:[%s229 + $0x18] sm:$0xff]
        %v280 = vld [vmem:[%s229 + $0x20] sm:$0xff]
        %v281 = vld [vmem:[%s229 + $0x28] sm:$0xff]
        %v282 = vld [vmem:[%s229 + $0x30] sm:$0xff]
        %v283 = vld [vmem:[%s229 + $0x38] sm:$0xff]
        %v284 = vpack.c.bf16 %v276, %v276
        %v285 = vpack.c.bf16 %v277, %v277
        %v286 = vpack.c.bf16 %v278, %v278
        %v287 = vpack.c.bf16 %v279, %v279
        %v288 = vpack.c.bf16 %v280, %v280
        %v289 = vpack.c.bf16 %v281, %v281
        %v290 = vpack.c.bf16 %v282, %v282
        %v291 = vpack.c.bf16 %v283, %v283
        %v292 = vld [vmem:[#allocation8] sm:$0xf]
        %v293 = vld [vmem:[#allocation8 + $0x4] sm:$0xf]
        %v294 = vld [vmem:[#allocation8 + $0x8] sm:$0xf]
        %v295 = vld [vmem:[#allocation8 + $0xc] sm:$0xf]
        %v296 = vld [vmem:[#allocation8 + $0x10] sm:$0xf]
        %v297 = vld [vmem:[#allocation8 + $0x14] sm:$0xf]
        %v298 = vld [vmem:[#allocation8 + $0x18] sm:$0xf]
        %v299 = vld [vmem:[#allocation8 + $0x1c] sm:$0xf]
        %v300 = vld [vmem:[%s2] sm:$0x1]
        %v302 = vperm.slane %v300, 0
        %v312 = vunpack.c.l.b16 %v284
        %v313 = vunpack.c.l.b16 %v285
        %v314 = vunpack.c.l.b16 %v286
        %v315 = vunpack.c.l.b16 %v287
        %v316 = vunpack.c.l.b16 %v288
        %v317 = vunpack.c.l.b16 %v289
        %v318 = vunpack.c.l.b16 %v290
        %v319 = vunpack.c.l.b16 %v291
        %v320 = vpack.c.b16 %v313, %v312
        %v321 = vpack.c.b16 %v315, %v314
        %v322 = vpack.c.b16 %v317, %v316
        %v323 = vpack.c.b16 %v319, %v318
        %v332 = vunpack.c.l.b16 %v292
        %v333 = vunpack.c.l.b16 %v293
        %v334 = vunpack.c.l.b16 %v294
        %v335 = vunpack.c.l.b16 %v295
        %v336 = vunpack.c.l.b16 %v296
        %v337 = vunpack.c.l.b16 %v297
        %v338 = vunpack.c.l.b16 %v298
        %v339 = vunpack.c.l.b16 %v299
        %v340 = vpack.c.b16 %v333, %v332
        %v341 = vpack.c.b16 %v335, %v334
        %v342 = vpack.c.b16 %v337, %v336
        %v343 = vpack.c.b16 %v339, %v338
        %vm348 = vcmask 523264
        %v350 = vsel %vm348, %v320, 0
        %v353 = vsel %vm348, %v321, 0
        %v356 = vsel %vm348, %v322, 0
        %v359 = vsel %vm348, %v323, 0
        %361 = vmatpush.bf16.msra.mxu0 0
        %362 = vmatpush.bf16.msra.mxu0 0
        %363 = vmatpush.bf16.msra.mxu0 0
        %364 = vmatpush.bf16.msra.mxu0 0
        %365 = vmatpush.bf16.msra.mxu0 %v343
        %366 = vmatpush.bf16.msra.mxu0 %v342
        %367 = vmatpush.bf16.msra.mxu0 %v341
        %368 = vmatpush.bf16.msra.mxu0 %v340
        %369 = vmatmul.bf16.gmra.mxu0 %v350
        %v370 = vpop.f32.mrf.mxu0
        %v371 = vadd.f32 %v302, %v370
        %v372 = vpop.f32.mrf.mxu0
        %v373 = vadd.f32 %v302, %v372
        %374 = vmatmul.bf16.gmra.mxu0 %v353
        %v375 = vpop.f32.mrf.mxu0
        %v376 = vadd.f32 %v302, %v375
        %v377 = vpop.f32.mrf.mxu0
        %v378 = vadd.f32 %v302, %v377
        %379 = vmatmul.bf16.gmra.mxu0 %v356
        %v380 = vpop.f32.mrf.mxu0
        %v381 = vadd.f32 %v302, %v380
        %v382 = vpop.f32.mrf.mxu0
        %v383 = vadd.f32 %v302, %v382
        %384 = vmatmul.bf16.gmra.mxu0 %v359
        %v385 = vpop.f32.mrf.mxu0
        %v386 = vadd.f32 %v302, %v385
        %v387 = vpop.f32.mrf.mxu0
        %v388 = vadd.f32 %v302, %v387
        %389 = vdwg.mxu0
        %v390 = vld [vmem:[#allocation2] sm:$0xff]
        %vm391 = vcmask 589312
        %v392 = vsel %vm391, %v371, -inf
        %v393 = vrot.slane %v392, 4
        %v394 = vmax.f32 %v392, %v393
        %v395 = vrot.slane %v394, 2
        %v396 = vmax.f32 %v394, %v395
        %v397 = vrot.slane %v396, 1
        %v398 = vmax.f32 %v396, %v397
        %v399 = vsel %vm391, %v373, -inf
        %v400 = vrot.slane %v399, 4
        %v401 = vmax.f32 %v399, %v400
        %v402 = vrot.slane %v401, 2
        %v403 = vmax.f32 %v401, %v402
        %v404 = vrot.slane %v403, 1
        %v405 = vmax.f32 %v403, %v404
        %v406 = vsel %vm391, %v376, -inf
        %v407 = vrot.slane %v406, 4
        %v408 = vmax.f32 %v406, %v407
        %v409 = vrot.slane %v408, 2
        %v410 = vmax.f32 %v408, %v409
        %v411 = vrot.slane %v410, 1
        %v412 = vmax.f32 %v410, %v411
        %v413 = vsel %vm391, %v378, -inf
        %v414 = vrot.slane %v413, 4
        %v415 = vmax.f32 %v413, %v414
        %v416 = vrot.slane %v415, 2
        %v417 = vmax.f32 %v415, %v416
        %v418 = vrot.slane %v417, 1
        %v419 = vmax.f32 %v417, %v418
        %v420 = vsel %vm391, %v381, -inf
        %v421 = vrot.slane %v420, 4
        %v422 = vmax.f32 %v420, %v421
        %v423 = vrot.slane %v422, 2
        %v424 = vmax.f32 %v422, %v423
        %v425 = vrot.slane %v424, 1
        %v426 = vmax.f32 %v424, %v425
        %v427 = vsel %vm391, %v383, -inf
        %v428 = vrot.slane %v427, 4
        %v429 = vmax.f32 %v427, %v428
        %v430 = vrot.slane %v429, 2
        %v431 = vmax.f32 %v429, %v430
        %v432 = vrot.slane %v431, 1
        %v433 = vmax.f32 %v431, %v432
        %v434 = vsel %vm391, %v386, -inf
        %v435 = vrot.slane %v434, 4
        %v436 = vmax.f32 %v434, %v435
        %v437 = vrot.slane %v436, 2
        %v438 = vmax.f32 %v436, %v437
        %v439 = vrot.slane %v438, 1
        %v440 = vmax.f32 %v438, %v439
        %v441 = vsel %vm391, %v388, -inf
        %v442 = vrot.slane %v441, 4
        %v443 = vmax.f32 %v441, %v442
        %v444 = vrot.slane %v443, 2
        %v445 = vmax.f32 %v443, %v444
        %v446 = vrot.slane %v445, 1
        %v447 = vmax.f32 %v445, %v446
        %vm456 = vcmask 1041409
        %v457 = vsel %vm456, %v405, %v398
        %vm458 = vcmask 1042434
        %v459 = vsel %vm458, %v412, %v457
        %vm460 = vcmask 1043459
        %v461 = vsel %vm460, %v419, %v459
        %vm462 = vcmask 1044484
        %v463 = vsel %vm462, %v426, %v461
        %vm464 = vcmask 1045509
        %v465 = vsel %vm464, %v433, %v463
        %vm466 = vcmask 1046534
        %v467 = vsel %vm466, %v440, %v465
        %vm468 = vcmask 1047559
        %v469 = vsel %vm468, %v447, %v467
        %470 = vrot.lane.b32.xlu0 %v469, 64
        %v471 = vpop.permute.xlu0 %470
        %v473 = vmax.f32 %v390, %v471
        %v474 = vsub.f32 %v390, %v473
        %v475 = vmul.f32 %v474, 1.442695
        %v476 = vpow.pop %v475
        %v478 = vrot.slane %v473, 1
        %v479 = vrot.slane %v473, 2
        %v480 = vrot.slane %v473, 3
        %v481 = vrot.slane %v473, 4
        %v482 = vrot.slane %v473, 5
        %v483 = vrot.slane %v473, 6
        %v484 = vrot.slane %v473, 7
        %v485 = vperm.slane %v473, 0
        %v486 = vperm.slane %v478, 0
        %v487 = vperm.slane %v479, 0
        %v488 = vperm.slane %v480, 0
        %v489 = vperm.slane %v481, 0
        %v490 = vperm.slane %v482, 0
        %v491 = vperm.slane %v483, 0
        %v492 = vperm.slane %v484, 0
        %493 = vrot.lane.b32.xlu0 %v485, 64
        %v494 = vpop.permute.xlu0 %493
        %495 = vrot.lane.b32.xlu0 %v486, 64
        %v496 = vpop.permute.xlu0 %495
        %497 = vrot.lane.b32.xlu0 %v487, 64
        %v498 = vpop.permute.xlu0 %497
        %499 = vrot.lane.b32.xlu0 %v488, 64
        %v500 = vpop.permute.xlu0 %499
        %501 = vrot.lane.b32.xlu0 %v489, 64
        %v502 = vpop.permute.xlu0 %501
        %503 = vrot.lane.b32.xlu0 %v490, 64
        %v504 = vpop.permute.xlu0 %503
        %505 = vrot.lane.b32.xlu0 %v491, 64
        %v506 = vpop.permute.xlu0 %505
        %507 = vrot.lane.b32.xlu0 %v492, 64
        %v508 = vpop.permute.xlu0 %507
        %v517 = vsub.f32 %v371, %v494
        %v518 = vsub.f32 %v373, %v496
        %v519 = vsub.f32 %v376, %v498
        %v520 = vsub.f32 %v378, %v500
        %v521 = vsub.f32 %v381, %v502
        %v522 = vsub.f32 %v383, %v504
        %v523 = vsub.f32 %v386, %v506
        %v524 = vsub.f32 %v388, %v508
        %v525 = vmul.f32 %v517, 1.442695
        %v526 = vpow.pop %v525
        %v527 = vmul.f32 %v518, 1.442695
        %v528 = vpow.pop %v527
        %v529 = vmul.f32 %v519, 1.442695
        %v530 = vpow.pop %v529
        %v531 = vmul.f32 %v520, 1.442695
        %v532 = vpow.pop %v531
        %v533 = vmul.f32 %v521, 1.442695
        %v534 = vpow.pop %v533
        %v535 = vmul.f32 %v522, 1.442695
        %v536 = vpow.pop %v535
        %v537 = vmul.f32 %v523, 1.442695
        %v538 = vpow.pop %v537
        %v539 = vmul.f32 %v524, 1.442695
        %v540 = vpow.pop %v539
        %v541 = vld [vmem:[#allocation3] sm:$0xff]
        %v542 = vmul.f32 %v476, %v541
        %v543 = vsel %vm391, %v526, 0.0
        %v544 = vrot.slane %v543, 4
        %v545 = vadd.f32 %v543, %v544
        %v546 = vrot.slane %v545, 2
        %v547 = vadd.f32 %v545, %v546
        %v548 = vrot.slane %v547, 1
        %v549 = vadd.f32 %v547, %v548
        %v550 = vsel %vm391, %v528, 0.0
        %v551 = vrot.slane %v550, 4
        %v552 = vadd.f32 %v550, %v551
        %v553 = vrot.slane %v552, 2
        %v554 = vadd.f32 %v552, %v553
        %v555 = vrot.slane %v554, 1
        %v556 = vadd.f32 %v554, %v555
        %v557 = vsel %vm391, %v530, 0.0
        %v558 = vrot.slane %v557, 4
        %v559 = vadd.f32 %v557, %v558
        %v560 = vrot.slane %v559, 2
        %v561 = vadd.f32 %v559, %v560
        %v562 = vrot.slane %v561, 1
        %v563 = vadd.f32 %v561, %v562
        %v564 = vsel %vm391, %v532, 0.0
        %v565 = vrot.slane %v564, 4
        %v566 = vadd.f32 %v564, %v565
        %v567 = vrot.slane %v566, 2
        %v568 = vadd.f32 %v566, %v567
        %v569 = vrot.slane %v568, 1
        %v570 = vadd.f32 %v568, %v569
        %v571 = vsel %vm391, %v534, 0.0
        %v572 = vrot.slane %v571, 4
        %v573 = vadd.f32 %v571, %v572
        %v574 = vrot.slane %v573, 2
        %v575 = vadd.f32 %v573, %v574
        %v576 = vrot.slane %v575, 1
        %v577 = vadd.f32 %v575, %v576
        %v578 = vsel %vm391, %v536, 0.0
        %v579 = vrot.slane %v578, 4
        %v580 = vadd.f32 %v578, %v579
        %v581 = vrot.slane %v580, 2
        %v582 = vadd.f32 %v580, %v581
        %v583 = vrot.slane %v582, 1
        %v584 = vadd.f32 %v582, %v583
        %v585 = vsel %vm391, %v538, 0.0
        %v586 = vrot.slane %v585, 4
        %v587 = vadd.f32 %v585, %v586
        %v588 = vrot.slane %v587, 2
        %v589 = vadd.f32 %v587, %v588
        %v590 = vrot.slane %v589, 1
        %v591 = vadd.f32 %v589, %v590
        %v592 = vsel %vm391, %v540, 0.0
        %v593 = vrot.slane %v592, 4
        %v594 = vadd.f32 %v592, %v593
        %v595 = vrot.slane %v594, 2
        %v596 = vadd.f32 %v594, %v595
        %v597 = vrot.slane %v596, 1
        %v598 = vadd.f32 %v596, %v597
        %v607 = vsel %vm456, %v556, %v549
        %v608 = vsel %vm458, %v563, %v607
        %v609 = vsel %vm460, %v570, %v608
        %v610 = vsel %vm462, %v577, %v609
        %v611 = vsel %vm464, %v584, %v610
        %v612 = vsel %vm466, %v591, %v611
        %v613 = vsel %vm468, %v598, %v612
        %614 = vrot.lane.b32.xlu0 %v613, 64
        %v615 = vpop.permute.xlu0 %614
        %v617 = vadd.f32 %v542, %v615
        %vm618 = vcmask 64512
        %619 = vst.msk [vmem:[#allocation3] sm:$0xff] %vm618, %v617
        %v620 = vpack.c.bf16 %v528, %v526
        %v621 = vpack.c.bf16 %v532, %v530
        %v622 = vpack.c.bf16 %v536, %v534
        %v623 = vpack.c.bf16 %v540, %v538
        %v624 = vld [vmem:[#allocation10] sm:$0xf]
        %629 = vrot.lane.b32.xlu0 %v620, 64
        %v630 = vpop.permute.xlu0 %629
        %631 = vrot.lane.b32.xlu0 %v621, 64
        %v632 = vpop.permute.xlu0 %631
        %633 = vrot.lane.b32.xlu0 %v622, 64
        %v634 = vpop.permute.xlu0 %633
        %635 = vrot.lane.b32.xlu0 %v623, 64
        %v636 = vpop.permute.xlu0 %635
        %v638 = vsel %vm618, %v630, 0
        %v641 = vsel %vm618, %v632, 0
        %v644 = vsel %vm618, %v634, 0
        %v647 = vsel %vm618, %v636, 0
        %vm649 = vcmask 1043456
        %v651 = vsel %vm649, %v624, 0
        %653 = vmatpush.bf16.msra.mxu0 0
        %654 = vmatpush.bf16.msra.mxu0 0
        %655 = vmatpush.bf16.msra.mxu0 0
        %656 = vmatpush.bf16.msra.mxu0 0
        %657 = vmatpush.bf16.msra.mxu0 0
        %658 = vmatpush.bf16.msra.mxu0 0
        %659 = vmatpush.bf16.msra.mxu0 0
        %660 = vmatpush.bf16.msra.mxu0 %v651
        %661 = vmatmul.bf16.gmra.mxu0 %v638
        %v662 = vpop.f32.mrf.mxu0
        %v663 = vadd.f32 0.0, %v662
        %v664 = vpop.f32.mrf.mxu0
        %v665 = vadd.f32 0.0, %v664
        %666 = vmatmul.bf16.gmra.mxu0 %v641
        %v667 = vpop.f32.mrf.mxu0
        %v668 = vadd.f32 0.0, %v667
        %v669 = vpop.f32.mrf.mxu0
        %v670 = vadd.f32 0.0, %v669
        %671 = vmatmul.bf16.gmra.mxu0 %v644
        %v672 = vpop.f32.mrf.mxu0
        %v673 = vadd.f32 0.0, %v672
        %v674 = vpop.f32.mrf.mxu0
        %v675 = vadd.f32 0.0, %v674
        %676 = vmatmul.bf16.gmra.mxu0 %v647
        %v677 = vpop.f32.mrf.mxu0
        %v678 = vadd.f32 0.0, %v677
        %v679 = vpop.f32.mrf.mxu0
        %v680 = vadd.f32 0.0, %v679
        %681 = vdwg.mxu0
        %v682 = vpack.c.bf16 %v476, %v476
        %v684 = vsel %vm618, %v682, 0
        %686 = vmatpush.bf16.msra.mxu0 0
        %687 = vmatpush.bf16.msra.mxu0 0
        %688 = vmatpush.bf16.msra.mxu0 0
        %689 = vmatpush.bf16.msra.mxu0 0
        %690 = vmatpush.bf16.msra.mxu0 0
        %691 = vmatpush.bf16.msra.mxu0 0
        %692 = vmatpush.bf16.msra.mxu0 0
        %693 = vmatpush.bf16.msra.mxu0 %v651
        %694 = vmatmul.bf16.gmra.mxu0 %v684
        %v695 = vpop.f32.mrf.mxu0
        %v696 = vadd.f32 0.0, %v695
        %v697 = vpop.f32.mrf.mxu0
        %698 = vdwg.mxu0
        %v699 = vmul.f32 %v663, %v371
        %v700 = vmul.f32 %v665, %v373
        %v701 = vmul.f32 %v668, %v376
        %v702 = vmul.f32 %v670, %v378
        %v703 = vmul.f32 %v673, %v381
        %v704 = vmul.f32 %v675, %v383
        %v705 = vmul.f32 %v678, %v386
        %v706 = vmul.f32 %v680, %v388
        %v707 = vsel %vm348, %v699, 0.0
        %v708 = vrot.slane %v707, 4
        %v709 = vadd.f32 %v707, %v708
        %v710 = vrot.slane %v709, 2
        %v711 = vadd.f32 %v709, %v710
        %v712 = vrot.slane %v711, 1
        %v713 = vadd.f32 %v711, %v712
        %v714 = vsel %vm348, %v700, 0.0
        %v715 = vrot.slane %v714, 4
        %v716 = vadd.f32 %v714, %v715
        %v717 = vrot.slane %v716, 2
        %v718 = vadd.f32 %v716, %v717
        %v719 = vrot.slane %v718, 1
        %v720 = vadd.f32 %v718, %v719
        %v721 = vsel %vm348, %v701, 0.0
        %v722 = vrot.slane %v721, 4
        %v723 = vadd.f32 %v721, %v722
        %v724 = vrot.slane %v723, 2
        %v725 = vadd.f32 %v723, %v724
        %v726 = vrot.slane %v725, 1
        %v727 = vadd.f32 %v725, %v726
        %v728 = vsel %vm348, %v702, 0.0
        %v729 = vrot.slane %v728, 4
        %v730 = vadd.f32 %v728, %v729
        %v731 = vrot.slane %v730, 2
        %v732 = vadd.f32 %v730, %v731
        %v733 = vrot.slane %v732, 1
        %v734 = vadd.f32 %v732, %v733
        %v735 = vsel %vm348, %v703, 0.0
        %v736 = vrot.slane %v735, 4
        %v737 = vadd.f32 %v735, %v736
        %v738 = vrot.slane %v737, 2
        %v739 = vadd.f32 %v737, %v738
        %v740 = vrot.slane %v739, 1
        %v741 = vadd.f32 %v739, %v740
        %v742 = vsel %vm348, %v704, 0.0
        %v743 = vrot.slane %v742, 4
        %v744 = vadd.f32 %v742, %v743
        %v745 = vrot.slane %v744, 2
        %v746 = vadd.f32 %v744, %v745
        %v747 = vrot.slane %v746, 1
        %v748 = vadd.f32 %v746, %v747
        %v749 = vsel %vm348, %v705, 0.0
        %v750 = vrot.slane %v749, 4
        %v751 = vadd.f32 %v749, %v750
        %v752 = vrot.slane %v751, 2
        %v753 = vadd.f32 %v751, %v752
        %v754 = vrot.slane %v753, 1
        %v755 = vadd.f32 %v753, %v754
        %v756 = vsel %vm348, %v706, 0.0
        %v757 = vrot.slane %v756, 4
        %v758 = vadd.f32 %v756, %v757
        %v759 = vrot.slane %v758, 2
        %v760 = vadd.f32 %v758, %v759
        %v761 = vrot.slane %v760, 1
        %v762 = vadd.f32 %v760, %v761
        %v763 = vld [vmem:[#allocation4] sm:$0xff]
        %v764 = vmul.f32 %v696, %v763
        %v773 = vsel %vm456, %v720, %v713
        %v774 = vsel %vm458, %v727, %v773
        %v775 = vsel %vm460, %v734, %v774
        %v776 = vsel %vm462, %v741, %v775
        %v777 = vsel %vm464, %v748, %v776
        %v778 = vsel %vm466, %v755, %v777
        %v779 = vsel %vm468, %v762, %v778
        %v781 = vadd.f32 %v764, %v779
        %782 = vst.msk [vmem:[#allocation4] sm:$0xff] %vm348, %v781
        %783 = vst.msk [vmem:[#allocation2] sm:$0xff] %vm618, %v473
        %p784 = scmp.eq.s32.totalorder %s27, 1
        // Predicated region
        $region53: #{tpu_custom_call.1} parent=35 // pred_check
          %p785 = pneg %p784
        $region54: #{tpu_custom_call.1} parent=35 // pred_check_branch
          %787 = sbr.rel (%p785) target = $region56
        $region55: #{tpu_custom_call.1} parent=35 // pred_region
          %v788 = vld [vmem:[#allocation3] sm:$0xff]
          %v789 = vrcp.pop %v788
          %v790 = vpack.c.bf16 %v789, %v789
          %v791 = vld [vmem:[#allocation10] sm:$0xf]
          %v793 = vsel %vm618, %v790, 0
          %v796 = vsel %vm649, %v791, 0
          %798 = vmatpush.bf16.msra.mxu0 0
          %799 = vmatpush.bf16.msra.mxu0 0
          %800 = vmatpush.bf16.msra.mxu0 0
          %801 = vmatpush.bf16.msra.mxu0 0
          %802 = vmatpush.bf16.msra.mxu0 0
          %803 = vmatpush.bf16.msra.mxu0 0
          %804 = vmatpush.bf16.msra.mxu0 0
          %805 = vmatpush.bf16.msra.mxu0 %v796
          %806 = vmatmul.bf16.gmra.mxu0 %v793
          %v807 = vpop.f32.mrf.mxu0
          %v808 = vadd.f32 0.0, %v807
          %v809 = vpop.f32.mrf.mxu0
          %810 = vdwg.mxu0
          %v811 = vld [vmem:[#allocation4] sm:$0xff]
          %v812 = vmul.f32 %v811, %v808
          %813 = vst.msk [vmem:[%s264] sm:$0xff] %vm348, %v812
        $region56: #{tpu_custom_call.1} parent=35 // pred_fallthru
          _
        %s814 = sand.u32 %s133, 1
        %s815 = scalar_lea.sflag [#allocation7], %s814
        %s816 = sand.u32 %s133, 1
        %s817 = smul.addr %s816, 8
        %s818 = scalar_lea.vmem [#allocation11], %s817
        // Predicated region
        $region57: #{tpu_custom_call.1} parent=35 // pred_check
          %p819 = pneg %p143
        $region58: #{tpu_custom_call.1} parent=35 // pred_check_branch
          %821 = sbr.rel (%p819) target = $region60
        $region59: #{tpu_custom_call.1} parent=35 // pred_region
          %823 = vsyncadd %s815, 0
          %s824 = smul.addr %s26, 8
          %s825 = scalar_lea.hbm %s4, %s824
          %s827 = sshll.u32 %s818, 4
          %s828 = int_to_ptr.vmem [resolvable:$true] %s827
          %s829 = sshll.u32 %s825, 4
          %s830 = int_to_ptr.hbm [resolvable:$true] %s829
          %832 = dma.vmem_to_hbm [thread:$0]  %s828, 128, %s830, %s815
        $region60: #{tpu_custom_call.1} parent=35 // pred_fallthru
          _
      $region36: #{tpu_custom_call.1} parent=5 // pred_fallthru
        _
      %p833 = scmp.le.s32.totalorder 2, %s17
      // Predicated region
      $region61: #{tpu_custom_call.1} parent=5 // pred_check
        %p834 = pneg %p833
      $region62: #{tpu_custom_call.1} parent=5 // pred_check_branch
        %836 = sbr.rel (%p834) target = $region64
      $region63: #{tpu_custom_call.1} parent=5 // pred_region
        %s837 = ssub.s32 %s17, 2
        // Predicated region
        $region65: #{tpu_custom_call.1} parent=63 // pred_check
          %p838 = pneg %p149
        $region66: #{tpu_custom_call.1} parent=63 // pred_check_branch
          %840 = sbr.rel (%p838) target = $region68
        $region67: #{tpu_custom_call.1} parent=63 // pred_region
          %s841 = sand.u32 %s134, 1
          %s842 = scalar_lea.sflag [#allocation7], %s841
          %s843 = sand.u32 %s134, 1
          %s844 = smul.addr %s843, 8
          %s845 = scalar_lea.vmem [#allocation11], %s844
          %847 = dma.done %s842, 128
        $region68: #{tpu_custom_call.1} parent=63 // pred_fallthru
          _
      $region64: #{tpu_custom_call.1} parent=5 // pred_fallthru
        _
    $region6: #{tpu_custom_call.1} parent=1 // loop_footer
      %s21 = sadd.s32 1, %s17
    $region7: #{tpu_custom_call.1} parent=1 // loop_footer_branch
      %16 = sbr.rel target = $region3
    $region8: #{tpu_custom_call.1} parent=1 // loop_exit
      _
    %848 = vsyncpa [#allocation6], 1
    %s849 = scalar_lea.sflag [#allocation6], 1
    %850 = vsyncpa %s849, 1
    %851 = vsyncpa [#allocation9], 1
    %852 = vsyncpa [#allocation7], 1
    %s853 = scalar_lea.sflag [#allocation7], 1
    %854 = vsyncpa %s853, 1

</llo_original>
